<compile_context>
chip_gen: v7x
topology: tpu7x:2x2x1
jax: 0.10.0
libtpu: 0.0.40
codegen_flags: <defaults>
</compile_context>

<pallas_src>
import functools

import jax
import jax.numpy as jnp
from jax.experimental import pallas as pl
from jax.experimental.pallas import tpu as pltpu


def prenorm_kernel(x_ref, gamma_ref, beta_ref, w_ref, b_ref, o_ref, *, d_valid):
    # x:     (TM, Dp)   gamma/beta: (1, Dp)
    # w:     (Dp, TN)   bias:       (1, TN)   out: (TM, TN)
    # Padded rows/columns of x, gamma, beta, w, bias are zero.
    x = x_ref[...].astype(jnp.float32)
    gamma = gamma_ref[...].astype(jnp.float32)
    beta = beta_ref[...].astype(jnp.float32)
    bias = b_ref[...].astype(jnp.float32)

    # LayerNorm over the (valid part of the) last axis.
    # Padded columns of x are zero, so the plain sum equals the valid-column sum.
    inv_d = jnp.float32(1.0 / d_valid)
    mean = jnp.sum(x, axis=-1, keepdims=True) * inv_d
    col = jax.lax.broadcasted_iota(jnp.int32, x.shape, dimension=1)
    centered = jnp.where(col < d_valid, x - mean, 0.0)
    var = jnp.sum(centered * centered, axis=-1, keepdims=True) * inv_d
    xn = centered * jax.lax.rsqrt(var + jnp.float32(1e-5))
    # Padded gamma/beta columns are zero, so padded columns of y are zero.
    y = xn * gamma + beta

    # fn: Linear(dim, dim).  Matmul operands in the weight dtype (bf16 W ->
    # native bf16 MXU path); accumulate in f32.
    out = jnp.dot(y.astype(w_ref.dtype), w_ref[...],
                  preferred_element_type=jnp.float32)
    o_ref[...] = (out + bias).astype(o_ref.dtype)


def _round_up(v, m):
    return ((v + m - 1) // m) * m


def prenorm(x, gamma, beta, w, b, *, tm=256):
    """x: (B, S, D) -> (B, S, D). Fused LayerNorm + Linear(D, D)."""
    B, S, D = x.shape
    M = B * S
    x2 = x.reshape(M, D)

    # ---- tiling / padding -------------------------------------------------
    # Lane-dense feature dim (multiple of 128).
    Dp = _round_up(max(D, 128), 128)
    # Sublane packing for the input dtype: f32 -> 8, bf16 -> 16, int8/fp8 -> 32.
    itemsize = jnp.dtype(x.dtype).itemsize
    pack = {4: 8, 2: 16, 1: 32}.get(itemsize, 8)
    tm = max(pack, (min(tm, _round_up(M, pack)) // pack) * pack)
    Mp = _round_up(M, tm)
    # N tile for W: keep the whole thing resident when small, tile when large.
    if Dp <= 1024:
        tn = Dp
    elif Dp % 512 == 0:
        tn = 512
    elif Dp % 256 == 0:
        tn = 256
    else:
        tn = 128

    # ---- zero-pad operands ------------------------------------------------
    xp = jnp.zeros((Mp, Dp), x.dtype).at[:M, :D].set(x2)
    gp = jnp.zeros((1, Dp), gamma.dtype).at[0, :D].set(gamma)
    btp = jnp.zeros((1, Dp), beta.dtype).at[0, :D].set(beta)
    wp = jnp.zeros((Dp, Dp), w.dtype).at[:D, :D].set(w)
    bp = jnp.zeros((1, Dp), b.dtype).at[0, :D].set(b)

    # ---- VMEM budget (double-buffered x / out / W tiles), capped for v7x ---
    w_itemsize = jnp.dtype(w.dtype).itemsize
    vmem_needed = (2 * tm * Dp * itemsize            # x blocks
                   + 2 * tm * tn * itemsize          # out blocks
                   + 2 * Dp * tn * w_itemsize        # W blocks
                   + 6 * Dp * 4)                     # gamma/beta/bias
    vmem_limit = int(min(max(2 * vmem_needed, 32 * 1024 * 1024),
                         64 * 1024 * 1024))

    kernel = functools.partial(prenorm_kernel, d_valid=D)

    out = pl.pallas_call(
        kernel,
        out_shape=jax.ShapeDtypeStruct((Mp, Dp), x.dtype),
        grid_spec=pltpu.PrefetchScalarGridSpec(
            num_scalar_prefetch=0,
            grid=(Mp // tm, Dp // tn),
            in_specs=[
                pl.BlockSpec((tm, Dp), lambda i, j: (i, 0)),   # x rows (resident over j)
                pl.BlockSpec((1, Dp), lambda i, j: (0, 0)),    # gamma
                pl.BlockSpec((1, Dp), lambda i, j: (0, 0)),    # beta
                pl.BlockSpec((Dp, tn), lambda i, j: (0, j)),   # W column tile
                pl.BlockSpec((1, tn), lambda i, j: (0, j)),    # bias tile
            ],
            out_specs=pl.BlockSpec((tm, tn), lambda i, j: (i, j)),
        ),
        compiler_params=pltpu.CompilerParams(
            dimension_semantics=("parallel", "arbitrary"),
            vmem_limit_bytes=vmem_limit),
    )(xp, gp, btp, wp, bp)

    return out[:M, :D].reshape(B, S, D)


def prenorm_ref(x, gamma, beta, w, b):
    """Pure-JAX reference for correctness check."""
    xf = x.astype(jnp.float32)
    mean = jnp.mean(xf, axis=-1, keepdims=True)
    var = jnp.mean((xf - mean) ** 2, axis=-1, keepdims=True)
    xn = (xf - mean) * jax.lax.rsqrt(var + 1e-5)
    y = xn * gamma + beta
    return (y @ w + b).astype(x.dtype)


if __name__ == "__main__":
    B, S, D = 2, 8, 32   # batch, seq, model dim

    key = jax.random.PRNGKey(0)
    kx, kw, kb = jax.random.split(key, 3)

    x = jax.random.normal(kx, (B, S, D), dtype=jnp.float32)

    # LayerNorm params: PyTorch default init (weight=1, bias=0)
    gamma = jnp.ones((D,), dtype=jnp.float32)
    beta = jnp.zeros((D,), dtype=jnp.float32)

    # fn = Linear(D, D): deterministic init
    w = jax.random.normal(kw, (D, D), dtype=jnp.float32) * (1.0 / jnp.sqrt(D))
    b = jax.random.normal(kb, (D,), dtype=jnp.float32) * 0.01

    out = prenorm(x, gamma, beta, w, b)
    out = jax.block_until_ready(out)

    ref = prenorm_ref(x, gamma, beta, w, b)
    assert out.shape == (B, S, D)
    assert jnp.allclose(out, ref, atol=1e-4, rtol=1e-4), "mismatch vs reference"

    print("KERNEL_OK")
</pallas_src>

<mosaic_0001>
module attributes {stable_mosaic.version = 11 : i64} {
  func.func @prenorm_kernel(%arg0: i32, %arg1: i32, %arg2: memref<16x128xf32, #tpu.memory_space<vmem>>, %arg3: memref<1x128xf32, #tpu.memory_space<vmem>>, %arg4: memref<1x128xf32, #tpu.memory_space<vmem>>, %arg5: memref<128x128xf32, #tpu.memory_space<vmem>>, %arg6: memref<1x128xf32, #tpu.memory_space<vmem>>, %arg7: memref<16x128xf32, #tpu.memory_space<vmem>>) attributes {dimension_semantics = [#tpu.dimension_semantics<parallel>, #tpu.dimension_semantics<arbitrary>], iteration_bounds = array<i64: 1, 1>, scalar_prefetch = 0 : i64, scratch_operands = 0 : i64, tpu.core_type = #tpu.core_type<tc>, window_params = [{transform_indices = @transform_0, window_bounds = array<i64: 16, 128>}, {pipeline_mode = #tpu.pipeline_mode<synchronous>, transform_indices = @transform_1, window_bounds = array<i64: 1, 128>}, {pipeline_mode = #tpu.pipeline_mode<synchronous>, transform_indices = @transform_2, window_bounds = array<i64: 1, 128>}, {transform_indices = @transform_3, window_bounds = array<i64: 128, 128>}, {transform_indices = @transform_4, window_bounds = array<i64: 1, 128>}, {transform_indices = @transform_5, window_bounds = array<i64: 16, 128>}]} {
    %c0 = arith.constant 0 : index
    %c0_0 = arith.constant 0 : index
    %0 = vector.load %arg2[%c0, %c0_0] : memref<16x128xf32, #tpu.memory_space<vmem>>, vector<16x128xf32>
    %c0_1 = arith.constant 0 : index
    %c0_2 = arith.constant 0 : index
    %1 = vector.load %arg3[%c0_1, %c0_2] : memref<1x128xf32, #tpu.memory_space<vmem>>, vector<1x128xf32>
    %c0_3 = arith.constant 0 : index
    %c0_4 = arith.constant 0 : index
    %2 = vector.load %arg4[%c0_3, %c0_4] : memref<1x128xf32, #tpu.memory_space<vmem>>, vector<1x128xf32>
    %c0_5 = arith.constant 0 : index
    %c0_6 = arith.constant 0 : index
    %3 = vector.load %arg6[%c0_5, %c0_6] : memref<1x128xf32, #tpu.memory_space<vmem>>, vector<1x128xf32>
    %cst = arith.constant dense<0.000000e+00> : vector<16xf32>
    %4 = vector.multi_reduction <add>, %0, %cst [1] : vector<16x128xf32> to vector<16xf32>
    %5 = vector.shape_cast %4 : vector<16xf32> to vector<16x1xf32>
    %cst_7 = arith.constant 3.125000e-02 : f32
    %6 = vector.broadcast %cst_7 : f32 to vector<16x1xf32>
    %7 = arith.mulf %5, %6 : vector<16x1xf32>
    %8 = tpu.iota {dimensions = array<i32: 1>} : vector<16x128xi32>
    %c32_i32 = arith.constant 32 : i32
    %9 = vector.broadcast %c32_i32 : i32 to vector<16x128xi32>
    %10 = arith.cmpi slt, %8, %9 : vector<16x128xi32>
    %11 = vector.broadcast %7 : vector<16x1xf32> to vector<16x128xf32>
    %12 = arith.subf %0, %11 : vector<16x128xf32>
    %cst_8 = arith.constant 0.000000e+00 : f32
    %13 = vector.broadcast %cst_8 : f32 to vector<16x128xf32>
    %14 = arith.select %10, %12, %13 : vector<16x128xi1>, vector<16x128xf32>
    %15 = arith.mulf %14, %14 : vector<16x128xf32>
    %cst_9 = arith.constant dense<0.000000e+00> : vector<16xf32>
    %16 = vector.multi_reduction <add>, %15, %cst_9 [1] : vector<16x128xf32> to vector<16xf32>
    %17 = vector.shape_cast %16 : vector<16xf32> to vector<16x1xf32>
    %cst_10 = arith.constant 3.125000e-02 : f32
    %18 = vector.broadcast %cst_10 : f32 to vector<16x1xf32>
    %19 = arith.mulf %17, %18 : vector<16x1xf32>
    %cst_11 = arith.constant 9.99999974E-6 : f32
    %20 = vector.broadcast %cst_11 : f32 to vector<16x1xf32>
    %21 = arith.addf %19, %20 : vector<16x1xf32>
    %22 = math.rsqrt %21 : vector<16x1xf32>
    %23 = vector.broadcast %22 : vector<16x1xf32> to vector<16x128xf32>
    %24 = arith.mulf %14, %23 : vector<16x128xf32>
    %25 = vector.broadcast %1 : vector<1x128xf32> to vector<16x128xf32>
    %26 = arith.mulf %24, %25 : vector<16x128xf32>
    %27 = vector.broadcast %2 : vector<1x128xf32> to vector<16x128xf32>
    %28 = arith.addf %26, %27 : vector<16x128xf32>
    %c0_12 = arith.constant 0 : index
    %c0_13 = arith.constant 0 : index
    %29 = vector.load %arg5[%c0_12, %c0_13] : memref<128x128xf32, #tpu.memory_space<vmem>>, vector<128x128xf32>
    %cst_14 = arith.constant dense<0.000000e+00> : vector<16x128xf32>
    %30 = tpu.matmul %28, %29, %cst_14 {dimension_numbers = #tpu.dot_dimension_numbers<[1], [0], [0], [1], [0, 0, 1, 1], [], []>} : vector<16x128xf32>, vector<128x128xf32>, vector<16x128xf32> -> vector<16x128xf32>
    %31 = vector.broadcast %3 : vector<1x128xf32> to vector<16x128xf32>
    %32 = arith.addf %30, %31 : vector<16x128xf32>
    %c0_15 = arith.constant 0 : index
    %c0_16 = arith.constant 0 : index
    %33 = vector.load %arg7[%c0_15, %c0_16] : memref<16x128xf32, #tpu.memory_space<vmem>>, vector<16x128xf32>
    tpu.vector_store %arg7[%c0_15, %c0_16], %32 {strides = array<i32>} : memref<16x128xf32, #tpu.memory_space<vmem>>, vector<16x128xf32>,
    return
  }
  func.func @transform_0(%arg0: i32, %arg1: i32) -> (i32, i32) {
    %c0_i32 = arith.constant 0 : i32
    %c0_i32_0 = arith.constant 0 : i32
    return %arg0, %c0_i32 : i32, i32
  }
  func.func @transform_1(%arg0: i32, %arg1: i32) -> (i32, i32) {
    %c0_i32 = arith.constant 0 : i32
    %c0_i32_0 = arith.constant 0 : i32
    %c0_i32_1 = arith.constant 0 : i32
    return %c0_i32, %c0_i32_0 : i32, i32
  }
  func.func @transform_2(%arg0: i32, %arg1: i32) -> (i32, i32) {
    %c0_i32 = arith.constant 0 : i32
    %c0_i32_0 = arith.constant 0 : i32
    %c0_i32_1 = arith.constant 0 : i32
    return %c0_i32, %c0_i32_0 : i32, i32
  }
  func.func @transform_3(%arg0: i32, %arg1: i32) -> (i32, i32) {
    %c0_i32 = arith.constant 0 : i32
    %c0_i32_0 = arith.constant 0 : i32
    return %c0_i32, %arg1 : i32, i32
  }
  func.func @transform_4(%arg0: i32, %arg1: i32) -> (i32, i32) {
    %c0_i32 = arith.constant 0 : i32
    %c0_i32_0 = arith.constant 0 : i32
    return %c0_i32, %arg1 : i32, i32
  }
  func.func @transform_5(%arg0: i32, %arg1: i32) -> (i32, i32) {
    %c0_i32 = arith.constant 0 : i32
    return %arg0, %arg1 : i32, i32
  }
}

</mosaic_0001>

<llo_original>
// kernel: tpu_custom_call.1
$region0: #{tpu_custom_call.1}
  #allocation0 [shape = 'u32[]', space=smem, size = 0x4, offset = 0x4, fixed_abs, tag = 'smem constant byte address 0x4 - core index']
  #allocation1 [shape = 'u32[144,128]{1,0:T(1,128)}', space=vmem, size = 0x12000, scoped, tag = 'internal scratch']
  %s0 = inlined_call_operand.hbm [shape: f32[16,128], index: 0, kind: input, shape index: {}]
  %s1 = inlined_call_operand.vmem [shape: f32[1,128], index: 1, kind: input, shape index: {}]
  %s2 = inlined_call_operand.vmem [shape: f32[1,128], index: 2, kind: input, shape index: {}]
  %s3 = inlined_call_operand.hbm [shape: f32[128,128], index: 3, kind: input, shape index: {}]
  %s4 = inlined_call_operand.vmem [shape: f32[1,128], index: 4, kind: input, shape index: {}]
  %s5 = inlined_call_operand.hbm [shape: f32[16,128], index: 5, kind: output, shape index: {}]
  %s6 = sld [smem:[#allocation0]]
  $region38: #{tpu_custom_call.1} parent=0
    _
  %s8 = ssub.s32 1, %s6
  %s9 = scalar_select 0, %s8, %s6
  $region1: #{tpu_custom_call.1} parent=0
    #allocation2 [shape = 'u8[8192]{0}', space=vmem, size = 0x2000, scoped, tag = 'input window, operand 0, single buffered']
    #allocation3 [shape = 's32[1]{0}', space=sflag, size = 0x4, scoped, tag = 'scoped memory for tpu_custom_call.1']
    #allocation4 [shape = 's32[1]{0}', space=sflag, size = 0x4, scoped, tag = 'scoped memory for tpu_custom_call.1']
    #allocation5 [shape = 'u8[65536]{0}', space=vmem, size = 0x10000, scoped, tag = 'input window, operand 3, single buffered']
    #allocation6 [shape = 's32[1]{0}', space=sflag, size = 0x4, scoped, tag = 'scoped memory for tpu_custom_call.1']
    #allocation7 [shape = 'u8[8192]{0}', space=vmem, size = 0x2000, scoped, tag = 'output window, operand 0, single buffered']
    %10 = vsyncpa [#allocation3], 0
    %11 = vsyncpa [#allocation6], 0
    %12 = vsyncpa [#allocation4], 0
    // Predicated region
    $region2: #{tpu_custom_call.1} parent=1 // pred_check
      _
    $region3: #{tpu_custom_call.1} parent=1 // pred_check_branch
      %14 = sbr.rel (0) target = $region5
    $region4: #{tpu_custom_call.1} parent=1 // pred_region
      %s16 = ssub.s32 256, 256
      %17 = vsyncadd [#allocation3], %s16
      %s18 = sshll.u32 [#allocation2], 4
      %s19 = int_to_ptr.vmem [resolvable:$true] %s18
      %24 = dma.hbm_to_vmem [thread:$0]  %s0, 256, %s19, [#allocation3], 128, 128, 8
    $region5: #{tpu_custom_call.1} parent=1 // pred_fallthru
      _
    // Predicated region
    $region6: #{tpu_custom_call.1} parent=1 // pred_check
      _
    $region7: #{tpu_custom_call.1} parent=1 // pred_check_branch
      %26 = sbr.rel (0) target = $region9
    $region8: #{tpu_custom_call.1} parent=1 // pred_region
      _
    $region9: #{tpu_custom_call.1} parent=1 // pred_fallthru
      _
    // Predicated region
    $region10: #{tpu_custom_call.1} parent=1 // pred_check
      _
    $region11: #{tpu_custom_call.1} parent=1 // pred_check_branch
      %28 = sbr.rel (0) target = $region13
    $region12: #{tpu_custom_call.1} parent=1 // pred_region
      _
    $region13: #{tpu_custom_call.1} parent=1 // pred_fallthru
      _
    // Predicated region
    $region14: #{tpu_custom_call.1} parent=1 // pred_check
      _
    $region15: #{tpu_custom_call.1} parent=1 // pred_check_branch
      %30 = sbr.rel (0) target = $region17
    $region16: #{tpu_custom_call.1} parent=1 // pred_region
      %s32 = ssub.s32 2048, 2048
      %33 = vsyncadd [#allocation6], %s32
      %s34 = sshll.u32 [#allocation5], 4
      %s35 = int_to_ptr.vmem [resolvable:$true] %s34
      %40 = dma.hbm_to_vmem [thread:$0]  %s3, 2048, %s35, [#allocation6], 128, 128, 8
    $region17: #{tpu_custom_call.1} parent=1 // pred_fallthru
      _
    // Predicated region
    $region18: #{tpu_custom_call.1} parent=1 // pred_check
      _
    $region19: #{tpu_custom_call.1} parent=1 // pred_check_branch
      %42 = sbr.rel (0) target = $region21
    $region20: #{tpu_custom_call.1} parent=1 // pred_region
      _
    $region21: #{tpu_custom_call.1} parent=1 // pred_fallthru
      _
    // Predicated region
    $region22: #{tpu_custom_call.1} parent=1 // pred_check
      _
    $region23: #{tpu_custom_call.1} parent=1 // pred_check_branch
      %44 = sbr.rel (0) target = $region25
    $region24: #{tpu_custom_call.1} parent=1 // pred_region
      %45 = dma.done [#allocation3], 256
    $region25: #{tpu_custom_call.1} parent=1 // pred_fallthru
      _
    // Predicated region
    $region26: #{tpu_custom_call.1} parent=1 // pred_check
      _
    $region27: #{tpu_custom_call.1} parent=1 // pred_check_branch
      %47 = sbr.rel (0) target = $region29
    $region28: #{tpu_custom_call.1} parent=1 // pred_region
      %48 = dma.done [#allocation6], 2048
    $region29: #{tpu_custom_call.1} parent=1 // pred_fallthru
      _
    %v49 = vld [vmem:[#allocation2] sm:$0xff]
    %v50 = vld [vmem:[#allocation2 + $0x8] sm:$0xff]
    %v51 = vld [vmem:[%s1] sm:$0x1]
    %v52 = vld [vmem:[%s2] sm:$0x1]
    %v53 = vld [vmem:[%s4] sm:$0x1]
    %54 = vadd.xlane.f32.xlu0 %v49
    %v55 = vpop.xlane.xlu0 %54
    %56 = vadd.xlane.f32.xlu0 %v50
    %v57 = vpop.xlane.xlu0 %56
    %v58 = vmul.f32 %v55, 0.03125
    %v59 = vmul.f32 %v57, 0.03125
    %v60 = vlaneseq
    %v61 = vand.u32 %v60, 127
    %vm62 = vcmp.lt.s32.totalorder %v61, 32
    %v63 = vsub.f32 %v49, %v58
    %v64 = vsub.f32 %v50, %v59
    %v65 = vsel %vm62, %v63, 0.0
    %v66 = vsel %vm62, %v64, 0.0
    %v67 = vmul.f32 %v65, %v65
    %v68 = vmul.f32 %v66, %v66
    %69 = vadd.xlane.f32.xlu0 %v67
    %v70 = vpop.xlane.xlu0 %69
    %71 = vadd.xlane.f32.xlu0 %v68
    %v72 = vpop.xlane.xlu0 %71
    %v73 = vmul.f32 %v70, 0.03125
    %v74 = vmul.f32 %v72, 0.03125
    %v75 = vadd.f32 %v73, 1e-05
    %v76 = vadd.f32 %v74, 1e-05
    %v77 = vrsqrt.pop %v75
    %v78 = vrsqrt.pop %v76
    %v79 = vmul.f32 %v65, %v77
    %v80 = vmul.f32 %v66, %v78
    %v82 = vlaneseq
    %v83 = vshrl.u32 %v82, 7
    %v84 = vsub.s32 0, %v83
    %v85 = vrot.slane %v51, %v84
    %v87 = vmul.f32 %v79, %v85
    %v88 = vmul.f32 %v80, %v85
    %v90 = vlaneseq
    %v91 = vshrl.u32 %v90, 7
    %v92 = vsub.s32 0, %v91
    %v93 = vrot.slane %v52, %v92
    %v95 = vadd.f32 %v87, %v93
    %v96 = vadd.f32 %v88, %v93
    %v97 = vld [vmem:[#allocation5] sm:$0xff]
    %v98 = vld [vmem:[#allocation5 + $0x8] sm:$0xff]
    %v99 = vld [vmem:[#allocation5 + $0x10] sm:$0xff]
    %v100 = vld [vmem:[#allocation5 + $0x18] sm:$0xff]
    %v101 = vld [vmem:[#allocation5 + $0x20] sm:$0xff]
    %v102 = vld [vmem:[#allocation5 + $0x28] sm:$0xff]
    %v103 = vld [vmem:[#allocation5 + $0x30] sm:$0xff]
    %v104 = vld [vmem:[#allocation5 + $0x38] sm:$0xff]
    %v105 = vld [vmem:[#allocation5 + $0x40] sm:$0xff]
    %v106 = vld [vmem:[#allocation5 + $0x48] sm:$0xff]
    %v107 = vld [vmem:[#allocation5 + $0x50] sm:$0xff]
    %v108 = vld [vmem:[#allocation5 + $0x58] sm:$0xff]
    %v109 = vld [vmem:[#allocation5 + $0x60] sm:$0xff]
    %v110 = vld [vmem:[#allocation5 + $0x68] sm:$0xff]
    %v111 = vld [vmem:[#allocation5 + $0x70] sm:$0xff]
    %v112 = vld [vmem:[#allocation5 + $0x78] sm:$0xff]
    %v114 = vlaneseq
    %v115 = vshrl.u32 %v114, 7
    %v116 = vsub.s32 0, %v115
    %v117 = vrot.slane %v53, %v116
    %119 = vmatprep.subr.mxu0 0.0
    %120 = vmatpush1.msra.mxu0 %v97
    %121 = vmatprep.subr.mxu0 0.0
    %122 = vmatpush1.msra.mxu0 %v98
    %123 = vmatprep.subr.mxu0 0.0
    %124 = vmatpush1.msra.mxu0 %v99
    %125 = vmatprep.subr.mxu0 0.0
    %126 = vmatpush1.msra.mxu0 %v100
    %127 = vmatprep.subr.mxu0 0.0
    %128 = vmatpush1.msra.mxu0 %v101
    %129 = vmatprep.subr.mxu0 0.0
    %130 = vmatpush1.msra.mxu0 %v102
    %131 = vmatprep.subr.mxu0 0.0
    %132 = vmatpush1.msra.mxu0 %v103
    %133 = vmatprep.subr.mxu0 0.0
    %134 = vmatpush1.msra.mxu0 %v104
    %135 = vmatprep.subr.mxu0 0.0
    %136 = vmatpush1.msra.mxu0 %v105
    %137 = vmatprep.subr.mxu0 0.0
    %138 = vmatpush1.msra.mxu0 %v106
    %139 = vmatprep.subr.mxu0 0.0
    %140 = vmatpush1.msra.mxu0 %v107
    %141 = vmatprep.subr.mxu0 0.0
    %142 = vmatpush1.msra.mxu0 %v108
    %143 = vmatprep.subr.mxu0 0.0
    %144 = vmatpush1.msra.mxu0 %v109
    %145 = vmatprep.subr.mxu0 0.0
    %146 = vmatpush1.msra.mxu0 %v110
    %147 = vmatprep.subr.mxu0 0.0
    %148 = vmatpush1.msra.mxu0 %v111
    %149 = vmatprep.subr.mxu0 0.0
    %150 = vmatpush1.msra.mxu0 %v112
    %151 = vmatprep.subr.mxu0 0.0
    %152 = vmatpush1.msra.mxu0 0.0
    %153 = vmatprep.subr.mxu0 0.0
    %154 = vmatpush1.msra.mxu0 0.0
    %155 = vmatprep.subr.mxu0 0.0
    %156 = vmatpush1.msra.mxu0 0.0
    %157 = vmatprep.subr.mxu0 0.0
    %158 = vmatpush1.msra.mxu0 0.0
    %159 = vmatprep.subr.mxu0 0.0
    %160 = vmatpush1.msra.mxu0 0.0
    %161 = vmatprep.subr.mxu0 0.0
    %162 = vmatpush1.msra.mxu0 0.0
    %163 = vmatprep.subr.mxu0 0.0
    %164 = vmatpush1.msra.mxu0 0.0
    %165 = vmatprep.subr.mxu0 0.0
    %166 = vmatpush1.msra.mxu0 0.0
    %167 = vmatprep.subr.mxu0 0.0
    %168 = vmatpush1.msra.mxu0 0.0
    %169 = vmatprep.subr.mxu0 0.0
    %170 = vmatpush1.msra.mxu0 0.0
    %171 = vmatprep.subr.mxu0 0.0
    %172 = vmatpush1.msra.mxu0 0.0
    %173 = vmatprep.subr.mxu0 0.0
    %174 = vmatpush1.msra.mxu0 0.0
    %175 = vmatprep.subr.mxu0 0.0
    %176 = vmatpush1.msra.mxu0 0.0
    %177 = vmatprep.subr.mxu0 0.0
    %178 = vmatpush1.msra.mxu0 0.0
    %179 = vmatprep.subr.mxu0 0.0
    %180 = vmatpush1.msra.mxu0 0.0
    %181 = vmatprep.subr.mxu0 0.0
    %182 = vmatpush1.msra.mxu0 0.0
    %183 = vmatprep.mubr.f32.mxu0 0.0
    %184 = vmatmul.mubr.f32.gmra.mrb[0].mxu0 %v95
    %v185 = vpop.f32.mrb[0].mxu0
    %v186 = vadd.f32 %v117, %v185
    %v187 = vpop.f32.mrb[0].mxu0
    %188 = vmatprep.mubr.f32.mxu0 0.0
    %189 = vmatmul.mubr.f32.gmra.mrb[0].mxu0 %v96
    %v190 = vpop.f32.mrb[0].mxu0
    %v191 = vadd.f32 %v117, %v190
    %v192 = vpop.f32.mrb[0].mxu0
    %193 = vdwg.mxu0
    %194 = vst [vmem:[#allocation7] sm:$0xff] %v186
    %195 = vst [vmem:[#allocation7 + $0x8] sm:$0xff] %v191
    // Predicated region
    $region30: #{tpu_custom_call.1} parent=1 // pred_check
      _
    $region31: #{tpu_custom_call.1} parent=1 // pred_check_branch
      %197 = sbr.rel (0) target = $region33
    $region32: #{tpu_custom_call.1} parent=1 // pred_region
      %s199 = ssub.s32 256, 256
      %200 = vsyncadd [#allocation4], %s199
      %s201 = sshll.u32 [#allocation7], 4
      %s202 = int_to_ptr.vmem [resolvable:$true] %s201
      %207 = dma.vmem_to_hbm [thread:$0]  %s202, 256, %s5, [#allocation4], 128, 128, 8
    $region33: #{tpu_custom_call.1} parent=1 // pred_fallthru
      _
    // Predicated region
    $region34: #{tpu_custom_call.1} parent=1 // pred_check
      _
    $region35: #{tpu_custom_call.1} parent=1 // pred_check_branch
      %209 = sbr.rel (0) target = $region37
    $region36: #{tpu_custom_call.1} parent=1 // pred_region
      %210 = dma.done [#allocation4], 256
    $region37: #{tpu_custom_call.1} parent=1 // pred_fallthru
      _
    %211 = vsyncpa [#allocation3], 1
    %212 = vsyncpa [#allocation6], 1
    %213 = vsyncpa [#allocation4], 1

</llo_original>
